<compile_context>
chip_gen: v7x
topology: tpu7x:2x2x1
jax: 0.10.0
libtpu: 0.0.40
codegen_flags: <defaults>
</compile_context>

<pallas_src>
import jax
import jax.numpy as jnp
from jax.experimental import pallas as pl
from jax.experimental.pallas import tpu as pltpu

LANES = 128


def linear_relu_kernel(x_ref, w_ref, b_ref, o_ref):
    # y = relu(x_packed @ W_blockdiag + b_tiled), f32 accumulation on the MXU.
    y = jnp.dot(x_ref[...], w_ref[...], preferred_element_type=jnp.float32)
    y = y + b_ref[...]
    o_ref[...] = jnp.maximum(y, 0.0).astype(o_ref.dtype)


def linear_relu(x, weight, bias, *, block_rows=4096):
    """x: [B, IN], weight: [OUT, IN] (PyTorch layout), bias: [OUT] -> [B, OUT]."""
    B, IN = x.shape
    OUT = weight.shape[0]
    dtype = x.dtype
    # Lane-dense packing requires square 8x8-style layers (the module spec).
    assert IN == OUT and LANES % IN == 0, "packed path assumes Linear(8, 8)-like shapes"
    PACK = LANES // IN  # 16 samples per packed row

    # Block-diagonal packed weight, already in natural [K, N] layout:
    # block (p, p) of size [IN, OUT] is W^T, off-diagonal blocks are zero.
    wt = weight.T.astype(dtype)                                   # [IN, OUT]
    eye = jnp.eye(PACK, dtype=dtype)
    w_packed = jnp.einsum("pq,io->piqo", eye, wt).reshape(LANES, LANES)
    b_packed = jnp.tile(bias, PACK).reshape(1, LANES).astype(dtype)

    # Pad the batch to a multiple of PACK so the row-major reshape packs 16
    # consecutive samples per 128-lane row, then reshape (zero-cost, row-major).
    Bp = pl.cdiv(B, PACK) * PACK
    if Bp != B:
        x = jnp.pad(x, ((0, Bp - B), (0, 0)))
    rows = Bp // PACK
    x_packed = x.reshape(rows, LANES)

    # Packed-row tile: multiple of 8 sublanes (or the full extent).  2 MiB per
    # f32 tile at the default -> per-step DMA is multi-microsecond on all
    # generations, amortizing the ~0.35us grid-step overhead; double-buffered
    # in+out (~8 MiB) fits v5e's 16 MiB scoped-VMEM default and v7x's 64 MiB.
    tb = rows if rows <= block_rows else block_rows
    if tb == rows and rows >= 16:
        # Keep >= 2 grid steps when there's real work so the "parallel" batch
        # axis can shard across v7x's two TensorCores (neutral on v5e/v6e).
        tb = ((rows + 1) // 2 + 7) // 8 * 8
    grid = (pl.cdiv(rows, tb),)

    cost = pl.CostEstimate(
        flops=2 * B * IN * OUT,
        transcendentals=0,
        bytes_accessed=x.dtype.itemsize * (Bp * IN + Bp * OUT)
        + 4 * (LANES * LANES + LANES),
    )

    out_packed = pl.pallas_call(
        linear_relu_kernel,
        out_shape=jax.ShapeDtypeStruct((rows, LANES), dtype),
        grid=grid,
        in_specs=[
            pl.BlockSpec((tb, LANES), lambda i: (i, 0)),      # packed activations (streamed)
            pl.BlockSpec((LANES, LANES), lambda i: (0, 0)),   # block-diag weight: VMEM-resident
            pl.BlockSpec((1, LANES), lambda i: (0, 0)),       # tiled bias: VMEM-resident
        ],
        out_specs=pl.BlockSpec((tb, LANES), lambda i: (i, 0)),
        compiler_params=pltpu.CompilerParams(
            dimension_semantics=("parallel",),
        ),
        cost_estimate=cost,
    )(x_packed, w_packed, b_packed)

    # Unpack and drop batch padding (zero-cost metadata reshape + slice).
    return out_packed.reshape(Bp, OUT)[:B]


if __name__ == "__main__":
    key = jax.random.PRNGKey(0)
    kx, kw, kb, kx2 = jax.random.split(key, 4)

    B, IN, OUT = 8, 8, 8  # nn.Linear(8, 8)

    # Deterministic synthetic parameters (PyTorch-style uniform init range).
    bound = 1.0 / (IN ** 0.5)
    weight = jax.random.uniform(kw, (OUT, IN), jnp.float32, -bound, bound)
    bias = jax.random.uniform(kb, (OUT,), jnp.float32, -bound, bound)
    x = jax.random.normal(kx, (B, IN), jnp.float32)

    out = linear_relu(x, weight, bias)
    out = jax.block_until_ready(out)
    ref = jnp.maximum(x @ weight.T + bias, 0.0)
    assert out.shape == (B, OUT)
    assert jnp.allclose(out, ref, atol=1e-5, rtol=1e-5)

    # Second check exercising the pad-to-16 packing path (B not a multiple of 16).
    x2 = jax.random.normal(kx2, (40, IN), jnp.float32)
    out2 = jax.block_until_ready(linear_relu(x2, weight, bias))
    ref2 = jnp.maximum(x2 @ weight.T + bias, 0.0)
    assert out2.shape == (40, OUT)
    assert jnp.allclose(out2, ref2, atol=1e-5, rtol=1e-5)

    print("KERNEL_OK")
</pallas_src>

<mosaic_0001>
module attributes {stable_mosaic.version = 11 : i64} {
  func.func @linear_relu_kernel(%arg0: i32, %arg1: memref<1x128xf32, #tpu.memory_space<vmem>>, %arg2: memref<128x128xf32, #tpu.memory_space<vmem>>, %arg3: memref<1x128xf32, #tpu.memory_space<vmem>>, %arg4: memref<1x128xf32, #tpu.memory_space<vmem>>) attributes {dimension_semantics = [#tpu.dimension_semantics<parallel>], iteration_bounds = array<i64: 1>, scalar_prefetch = 0 : i64, scratch_operands = 0 : i64, tpu.core_type = #tpu.core_type<tc>, window_params = [{transform_indices = @transform_0, window_bounds = array<i64: 1, 128>}, {pipeline_mode = #tpu.pipeline_mode<synchronous>, transform_indices = @transform_1, window_bounds = array<i64: 128, 128>}, {pipeline_mode = #tpu.pipeline_mode<synchronous>, transform_indices = @transform_2, window_bounds = array<i64: 1, 128>}, {transform_indices = @transform_3, window_bounds = array<i64: 1, 128>}]} {
    %c0 = arith.constant 0 : index
    %c0_0 = arith.constant 0 : index
    %0 = vector.load %arg1[%c0, %c0_0] : memref<1x128xf32, #tpu.memory_space<vmem>>, vector<1x128xf32>
    %c0_1 = arith.constant 0 : index
    %c0_2 = arith.constant 0 : index
    %1 = vector.load %arg2[%c0_1, %c0_2] : memref<128x128xf32, #tpu.memory_space<vmem>>, vector<128x128xf32>
    %cst = arith.constant dense<0.000000e+00> : vector<1x128xf32>
    %2 = tpu.matmul %0, %1, %cst {dimension_numbers = #tpu.dot_dimension_numbers<[1], [0], [0], [1], [0, 0, 1, 1], [], []>} : vector<1x128xf32>, vector<128x128xf32>, vector<1x128xf32> -> vector<1x128xf32>
    %c0_3 = arith.constant 0 : index
    %c0_4 = arith.constant 0 : index
    %3 = vector.load %arg3[%c0_3, %c0_4] : memref<1x128xf32, #tpu.memory_space<vmem>>, vector<1x128xf32>
    %4 = arith.addf %2, %3 : vector<1x128xf32>
    %cst_5 = arith.constant 0.000000e+00 : f32
    %5 = vector.broadcast %cst_5 : f32 to vector<1x128xf32>
    %6 = arith.maximumf %4, %5 : vector<1x128xf32>
    %c0_6 = arith.constant 0 : index
    %c0_7 = arith.constant 0 : index
    %7 = vector.load %arg4[%c0_6, %c0_7] : memref<1x128xf32, #tpu.memory_space<vmem>>, vector<1x128xf32>
    tpu.vector_store %arg4[%c0_6, %c0_7], %6 {strides = array<i32>} : memref<1x128xf32, #tpu.memory_space<vmem>>, vector<1x128xf32>,
    return
  }
  func.func @transform_0(%arg0: i32) -> (i32, i32) {
    %c0_i32 = arith.constant 0 : i32
    %c0_i32_0 = arith.constant 0 : i32
    return %arg0, %c0_i32 : i32, i32
  }
  func.func @transform_1(%arg0: i32) -> (i32, i32) {
    %c0_i32 = arith.constant 0 : i32
    %c0_i32_0 = arith.constant 0 : i32
    %c0_i32_1 = arith.constant 0 : i32
    return %c0_i32, %c0_i32_0 : i32, i32
  }
  func.func @transform_2(%arg0: i32) -> (i32, i32) {
    %c0_i32 = arith.constant 0 : i32
    %c0_i32_0 = arith.constant 0 : i32
    %c0_i32_1 = arith.constant 0 : i32
    return %c0_i32, %c0_i32_0 : i32, i32
  }
  func.func @transform_3(%arg0: i32) -> (i32, i32) {
    %c0_i32 = arith.constant 0 : i32
    %c0_i32_0 = arith.constant 0 : i32
    return %arg0, %c0_i32 : i32, i32
  }
}

</mosaic_0001>

<llo_original>
// kernel: tpu_custom_call.1
$region0: #{tpu_custom_call.1}
  #allocation0 [shape = 'u32[]', space=smem, size = 0x4, offset = 0x4, fixed_abs, tag = 'smem constant byte address 0x4 - core index']
  #allocation1 [shape = 'u32[144,128]{1,0:T(1,128)}', space=vmem, size = 0x12000, scoped, tag = 'internal scratch']
  %s0 = inlined_call_operand.hbm [shape: f32[1,128], index: 0, kind: input, shape index: {}]
  %s1 = inlined_call_operand.hbm [shape: f32[128,128], index: 1, kind: input, shape index: {}]
  %s2 = inlined_call_operand.vmem [shape: f32[1,128], index: 2, kind: input, shape index: {}]
  %s3 = inlined_call_operand.hbm [shape: f32[1,128], index: 3, kind: output, shape index: {}]
  %s4 = sld [smem:[#allocation0]]
  $region30: #{tpu_custom_call.1} parent=0
    _
  %s6 = ssub.s32 1, %s4
  %s7 = scalar_select 0, %s6, %s4
  $region1: #{tpu_custom_call.1} parent=0
    #allocation2 [shape = 'u8[512]{0}', space=vmem, size = 0x400, scoped, tag = 'input window, operand 0, single buffered']
    #allocation3 [shape = 's32[1]{0}', space=sflag, size = 0x4, scoped, tag = 'scoped memory for tpu_custom_call.1']
    #allocation4 [shape = 's32[1]{0}', space=sflag, size = 0x4, scoped, tag = 'scoped memory for tpu_custom_call.1']
    #allocation5 [shape = 'u8[65536]{0}', space=vmem, size = 0x10000, scoped, tag = 'input window, operand 1, single buffered']
    #allocation6 [shape = 's32[1]{0}', space=sflag, size = 0x4, scoped, tag = 'scoped memory for tpu_custom_call.1']
    #allocation7 [shape = 'u8[512]{0}', space=vmem, size = 0x400, scoped, tag = 'output window, operand 0, single buffered']
    %8 = vsyncpa [#allocation3], 0
    %9 = vsyncpa [#allocation6], 0
    %10 = vsyncpa [#allocation4], 0
    // Predicated region
    $region2: #{tpu_custom_call.1} parent=1 // pred_check
      _
    $region3: #{tpu_custom_call.1} parent=1 // pred_check_branch
      %12 = sbr.rel (0) target = $region5
    $region4: #{tpu_custom_call.1} parent=1 // pred_region
      %s14 = ssub.s32 16, 16
      %15 = vsyncadd [#allocation3], %s14
      %s17 = sshll.u32 [#allocation2], 4
      %s18 = int_to_ptr.vmem [resolvable:$true] %s17
      %20 = dma.hbm_to_vmem [thread:$0]  %s0, 16, %s18, [#allocation3]
    $region5: #{tpu_custom_call.1} parent=1 // pred_fallthru
      _
    // Predicated region
    $region6: #{tpu_custom_call.1} parent=1 // pred_check
      _
    $region7: #{tpu_custom_call.1} parent=1 // pred_check_branch
      %22 = sbr.rel (0) target = $region9
    $region8: #{tpu_custom_call.1} parent=1 // pred_region
      %s24 = ssub.s32 2048, 2048
      %25 = vsyncadd [#allocation6], %s24
      %s26 = sshll.u32 [#allocation5], 4
      %s27 = int_to_ptr.vmem [resolvable:$true] %s26
      %32 = dma.hbm_to_vmem [thread:$0]  %s1, 2048, %s27, [#allocation6], 128, 128, 8
    $region9: #{tpu_custom_call.1} parent=1 // pred_fallthru
      _
    // Predicated region
    $region10: #{tpu_custom_call.1} parent=1 // pred_check
      _
    $region11: #{tpu_custom_call.1} parent=1 // pred_check_branch
      %34 = sbr.rel (0) target = $region13
    $region12: #{tpu_custom_call.1} parent=1 // pred_region
      _
    $region13: #{tpu_custom_call.1} parent=1 // pred_fallthru
      _
    // Predicated region
    $region14: #{tpu_custom_call.1} parent=1 // pred_check
      _
    $region15: #{tpu_custom_call.1} parent=1 // pred_check_branch
      %36 = sbr.rel (0) target = $region17
    $region16: #{tpu_custom_call.1} parent=1 // pred_region
      %37 = dma.done [#allocation3], 16
    $region17: #{tpu_custom_call.1} parent=1 // pred_fallthru
      _
    // Predicated region
    $region18: #{tpu_custom_call.1} parent=1 // pred_check
      _
    $region19: #{tpu_custom_call.1} parent=1 // pred_check_branch
      %39 = sbr.rel (0) target = $region21
    $region20: #{tpu_custom_call.1} parent=1 // pred_region
      %40 = dma.done [#allocation6], 2048
    $region21: #{tpu_custom_call.1} parent=1 // pred_fallthru
      _
    %v41 = vld [vmem:[#allocation2] sm:$0x1]
    %v42 = vld [vmem:[#allocation5] sm:$0xff]
    %v43 = vld [vmem:[#allocation5 + $0x8] sm:$0xff]
    %v44 = vld [vmem:[#allocation5 + $0x10] sm:$0xff]
    %v45 = vld [vmem:[#allocation5 + $0x18] sm:$0xff]
    %v46 = vld [vmem:[#allocation5 + $0x20] sm:$0xff]
    %v47 = vld [vmem:[#allocation5 + $0x28] sm:$0xff]
    %v48 = vld [vmem:[#allocation5 + $0x30] sm:$0xff]
    %v49 = vld [vmem:[#allocation5 + $0x38] sm:$0xff]
    %v50 = vld [vmem:[#allocation5 + $0x40] sm:$0xff]
    %v51 = vld [vmem:[#allocation5 + $0x48] sm:$0xff]
    %v52 = vld [vmem:[#allocation5 + $0x50] sm:$0xff]
    %v53 = vld [vmem:[#allocation5 + $0x58] sm:$0xff]
    %v54 = vld [vmem:[#allocation5 + $0x60] sm:$0xff]
    %v55 = vld [vmem:[#allocation5 + $0x68] sm:$0xff]
    %v56 = vld [vmem:[#allocation5 + $0x70] sm:$0xff]
    %v57 = vld [vmem:[#allocation5 + $0x78] sm:$0xff]
    %v58 = vld [vmem:[%s2] sm:$0x1]
    %59 = vmatprep.subr.mxu0 0.0
    %60 = vmatpush1.msra.mxu0 %v42
    %61 = vmatprep.subr.mxu0 0.0
    %62 = vmatpush1.msra.mxu0 %v43
    %63 = vmatprep.subr.mxu0 0.0
    %64 = vmatpush1.msra.mxu0 %v44
    %65 = vmatprep.subr.mxu0 0.0
    %66 = vmatpush1.msra.mxu0 %v45
    %67 = vmatprep.subr.mxu0 0.0
    %68 = vmatpush1.msra.mxu0 %v46
    %69 = vmatprep.subr.mxu0 0.0
    %70 = vmatpush1.msra.mxu0 %v47
    %71 = vmatprep.subr.mxu0 0.0
    %72 = vmatpush1.msra.mxu0 %v48
    %73 = vmatprep.subr.mxu0 0.0
    %74 = vmatpush1.msra.mxu0 %v49
    %75 = vmatprep.subr.mxu0 0.0
    %76 = vmatpush1.msra.mxu0 %v50
    %77 = vmatprep.subr.mxu0 0.0
    %78 = vmatpush1.msra.mxu0 %v51
    %79 = vmatprep.subr.mxu0 0.0
    %80 = vmatpush1.msra.mxu0 %v52
    %81 = vmatprep.subr.mxu0 0.0
    %82 = vmatpush1.msra.mxu0 %v53
    %83 = vmatprep.subr.mxu0 0.0
    %84 = vmatpush1.msra.mxu0 %v54
    %85 = vmatprep.subr.mxu0 0.0
    %86 = vmatpush1.msra.mxu0 %v55
    %87 = vmatprep.subr.mxu0 0.0
    %88 = vmatpush1.msra.mxu0 %v56
    %89 = vmatprep.subr.mxu0 0.0
    %90 = vmatpush1.msra.mxu0 %v57
    %91 = vmatprep.subr.mxu0 0.0
    %92 = vmatpush1.msra.mxu0 0.0
    %93 = vmatprep.subr.mxu0 0.0
    %94 = vmatpush1.msra.mxu0 0.0
    %95 = vmatprep.subr.mxu0 0.0
    %96 = vmatpush1.msra.mxu0 0.0
    %97 = vmatprep.subr.mxu0 0.0
    %98 = vmatpush1.msra.mxu0 0.0
    %99 = vmatprep.subr.mxu0 0.0
    %100 = vmatpush1.msra.mxu0 0.0
    %101 = vmatprep.subr.mxu0 0.0
    %102 = vmatpush1.msra.mxu0 0.0
    %103 = vmatprep.subr.mxu0 0.0
    %104 = vmatpush1.msra.mxu0 0.0
    %105 = vmatprep.subr.mxu0 0.0
    %106 = vmatpush1.msra.mxu0 0.0
    %107 = vmatprep.subr.mxu0 0.0
    %108 = vmatpush1.msra.mxu0 0.0
    %109 = vmatprep.subr.mxu0 0.0
    %110 = vmatpush1.msra.mxu0 0.0
    %111 = vmatprep.subr.mxu0 0.0
    %112 = vmatpush1.msra.mxu0 0.0
    %113 = vmatprep.subr.mxu0 0.0
    %114 = vmatpush1.msra.mxu0 0.0
    %115 = vmatprep.subr.mxu0 0.0
    %116 = vmatpush1.msra.mxu0 0.0
    %117 = vmatprep.subr.mxu0 0.0
    %118 = vmatpush1.msra.mxu0 0.0
    %119 = vmatprep.subr.mxu0 0.0
    %120 = vmatpush1.msra.mxu0 0.0
    %121 = vmatprep.subr.mxu0 0.0
    %122 = vmatpush1.msra.mxu0 0.0
    %123 = vmatprep.mubr.f32.mxu0 0.0
    %124 = vmatmul.mubr.f32.gmra.mrb[0].mxu0 %v41
    %v125 = vpop.f32.mrb[0].mxu0
    %v126 = vadd.f32 %v58, %v125
    %v127 = vpop.f32.mrb[0].mxu0
    %128 = vdwg.mxu0
    %v129 = vmax.f32 %v126, 0.0
    %130 = vst [vmem:[#allocation7] sm:$0x1] %v129
    // Predicated region
    $region22: #{tpu_custom_call.1} parent=1 // pred_check
      _
    $region23: #{tpu_custom_call.1} parent=1 // pred_check_branch
      %132 = sbr.rel (0) target = $region25
    $region24: #{tpu_custom_call.1} parent=1 // pred_region
      %s134 = ssub.s32 16, 16
      %135 = vsyncadd [#allocation4], %s134
      %s137 = sshll.u32 [#allocation7], 4
      %s138 = int_to_ptr.vmem [resolvable:$true] %s137
      %140 = dma.vmem_to_hbm [thread:$0]  %s138, 16, %s3, [#allocation4]
    $region25: #{tpu_custom_call.1} parent=1 // pred_fallthru
      _
    // Predicated region
    $region26: #{tpu_custom_call.1} parent=1 // pred_check
      _
    $region27: #{tpu_custom_call.1} parent=1 // pred_check_branch
      %142 = sbr.rel (0) target = $region29
    $region28: #{tpu_custom_call.1} parent=1 // pred_region
      %143 = dma.done [#allocation4], 16
    $region29: #{tpu_custom_call.1} parent=1 // pred_fallthru
      _
    %144 = vsyncpa [#allocation3], 1
    %145 = vsyncpa [#allocation6], 1
    %146 = vsyncpa [#allocation4], 1

</llo_original>
